<compile_context>
chip_gen: v7x
topology: tpu7x:2x2x1
jax: 0.10.0
libtpu: 0.0.40
codegen_flags: <defaults>
</compile_context>

<pallas_src>
import functools

import jax
import jax.numpy as jnp
from jax import lax
from jax.experimental import pallas as pl
from jax.experimental.pallas import tpu as pltpu

SMOOTH = 1e-6
LANE = 128
TILE_R_MAX = 4096   # 4096*128*4B = 2 MiB per input block
NCORES = 2          # leading "parallel" axis: shards the reduction over both TCs on v7x


def _round_up(x, m):
    return (x + m - 1) // m * m


def _make_kernel(smooth, tile_r, inner_steps, n_valid_rows, need_mask):
    """Each grid step folds a (tile_r, 128) slab into an (8,128) partial-sum block."""

    def kernel(pred_ref, tgt_ref, out_ref):
        c = pl.program_id(0)   # "core" (parallel) axis
        j = pl.program_id(1)   # reduction (arbitrary) axis

        @pl.when(j == 0)
        def _():
            out_ref[...] = jnp.zeros_like(out_ref)

        p = pred_ref[...].astype(jnp.float32)
        t = tgt_ref[...].astype(jnp.float32)

        contrib = t * jnp.log(p + smooth)          # VPU + EUP, hidden under the DMAs

        if need_mask:
            # Unclamped linear block id: rows >= n_valid_rows belong either to the
            # Pallas-padded partial last block (uninitialized VMEM garbage) or to a
            # clamped/duplicated block on the other core -> zero their contribution.
            # A single select after the log is enough: NaN/Inf from garbage inputs
            # never survives the select.
            b = c * inner_steps + j
            row = lax.broadcasted_iota(jnp.int32, (tile_r, LANE), 0) + b * tile_r
            contrib = jnp.where(row < n_valid_rows, contrib, 0.0)

        # Fold sublane groups with pure element-wise vreg adds (no XLU per step).
        out_ref[...] += contrib.reshape(1, tile_r // 8, 8, LANE).sum(axis=1)

    return kernel


@functools.partial(jax.jit, static_argnames=("smooth",))
def multi_ce_loss(pred, target, smooth=SMOOTH):
    """Pallas equivalent of MultiCELoss.forward. Returns a scalar ()."""
    assert pred.shape == target.shape
    n = pred.size

    pred_f = pred.reshape(-1)
    tgt_f = target.reshape(-1)

    # Free reshape to a lane-dense (rows, 128) slab when n % 128 == 0 (common case).
    pad = (-n) % LANE
    if pad:
        # TODO(synk): ragged tail (numel % 128 != 0) still materializes a padded copy;
        # neutral padding (pred=1 -> finite log, target=0 -> contributes 0).
        pred_f = jnp.concatenate([pred_f, jnp.ones((pad,), pred_f.dtype)])
        tgt_f = jnp.concatenate([tgt_f, jnp.zeros((pad,), tgt_f.dtype)])

    rows = (n + pad) // LANE
    pred2 = pred_f.reshape(rows, LANE)
    tgt2 = tgt_f.reshape(rows, LANE)

    tile_r = min(TILE_R_MAX, _round_up(rows, 8))         # multiple of 8, <= 2 MiB/block
    total_blocks = pl.cdiv(rows, tile_r)
    inner_steps = pl.cdiv(total_blocks, NCORES)
    need_mask = (rows % tile_r != 0) or (inner_steps * NCORES != total_blocks)

    def in_map(c, j):
        # Clamp so the DMA never walks past the array; the kernel's row mask zeroes
        # any duplicated / out-of-range contribution.
        return (jnp.minimum(c * inner_steps + j, total_blocks - 1), 0)

    partial = pl.pallas_call(
        _make_kernel(smooth, tile_r, inner_steps, rows, need_mask),
        out_shape=jax.ShapeDtypeStruct((NCORES, 8, LANE), jnp.float32),
        grid_spec=pltpu.PrefetchScalarGridSpec(
            num_scalar_prefetch=0,
            grid=(NCORES, inner_steps),
            in_specs=[
                pl.BlockSpec((tile_r, LANE), in_map),
                pl.BlockSpec((tile_r, LANE), in_map),
            ],
            out_specs=pl.BlockSpec((1, 8, LANE), lambda c, j: (c, 0, 0)),
        ),
        compiler_params=pltpu.CompilerParams(
            dimension_semantics=("parallel", "arbitrary"),
            vmem_limit_bytes=32 << 20,   # headroom for the 8 MiB double-buffered blocks
        ),
    )(pred2, tgt2)

    # Final tiny reduction (2*8*128 partials) + mean scaling in plain JAX.
    return -jnp.sum(partial) / jnp.float32(n)


if __name__ == "__main__":
    # MultiCELoss has no learnable parameters; only the scalar smooth=1e-6.
    key = jax.random.PRNGKey(0)
    k_pred, k_tgt = jax.random.split(key)

    # pred / target: (Batch, N, Channel, H, W)
    B, N, C, H, W = 2, 3, 4, 16, 16
    pred = jax.random.uniform(k_pred, (B, N, C, H, W), dtype=jnp.float32,
                              minval=1e-3, maxval=1.0)
    target = jax.random.uniform(k_tgt, (B, N, C, H, W), dtype=jnp.float32)

    loss = multi_ce_loss(pred, target)
    loss = jax.block_until_ready(loss)

    # reference (plain JAX) check
    ref = -jnp.mean(target * jnp.log(pred + SMOOTH))
    assert loss.shape == ()
    assert jnp.allclose(loss, ref, rtol=1e-5, atol=1e-6), (loss, ref)

    print("KERNEL_OK")
</pallas_src>

<mosaic_0001>
module attributes {stable_mosaic.version = 11 : i64} {
  func.func @kernel(%arg0: i32, %arg1: i32, %arg2: memref<48x128xf32, #tpu.memory_space<vmem>>, %arg3: memref<48x128xf32, #tpu.memory_space<vmem>>, %arg4: memref<1x8x128xf32, #tpu.memory_space<vmem>>) attributes {dimension_semantics = [#tpu.dimension_semantics<parallel>, #tpu.dimension_semantics<arbitrary>], iteration_bounds = array<i64: 2, 1>, scalar_prefetch = 0 : i64, scratch_operands = 0 : i64, tpu.core_type = #tpu.core_type<tc>, window_params = [{transform_indices = @transform_0, window_bounds = array<i64: 48, 128>}, {transform_indices = @transform_1, window_bounds = array<i64: 48, 128>}, {transform_indices = @transform_2, window_bounds = array<i64: 1, 8, 128>}]} {
    %c0_i32 = arith.constant 0 : i32
    %0 = arith.cmpi eq, %arg1, %c0_i32 : i32
    %1 = arith.extui %0 : i1 to i32
    %c0_i32_0 = arith.constant 0 : i32
    %2 = arith.cmpi ne, %1, %c0_i32_0 : i32
    scf.if %2 {
      %cst_13 = arith.constant 0.000000e+00 : f32
      %24 = vector.broadcast %cst_13 : f32 to vector<1x8x128xf32>
      %c0_14 = arith.constant 0 : index
      %c0_15 = arith.constant 0 : index
      %c0_16 = arith.constant 0 : index
      %25 = vector.load %arg4[%c0_14, %c0_15, %c0_16] : memref<1x8x128xf32, #tpu.memory_space<vmem>>, vector<1x8x128xf32>
      tpu.vector_store %arg4[%c0_14, %c0_15, %c0_16], %24 {strides = array<i32>} : memref<1x8x128xf32, #tpu.memory_space<vmem>>, vector<1x8x128xf32>,
    } else {
    }
    %c0 = arith.constant 0 : index
    %c0_1 = arith.constant 0 : index
    %3 = vector.load %arg2[%c0, %c0_1] : memref<48x128xf32, #tpu.memory_space<vmem>>, vector<48x128xf32>
    %c0_2 = arith.constant 0 : index
    %c0_3 = arith.constant 0 : index
    %4 = vector.load %arg3[%c0_2, %c0_3] : memref<48x128xf32, #tpu.memory_space<vmem>>, vector<48x128xf32>
    %cst = arith.constant 9.99999997E-7 : f32
    %5 = vector.broadcast %cst : f32 to vector<48x128xf32>
    %6 = arith.addf %3, %5 : vector<48x128xf32>
    %7 = math.log %6 : vector<48x128xf32>
    %8 = arith.mulf %4, %7 : vector<48x128xf32>
    %c1_i32 = arith.constant 1 : i32
    %9 = arith.muli %arg0, %c1_i32 : i32
    %10 = arith.addi %9, %arg1 : i32
    %11 = tpu.iota {dimensions = array<i32: 0>} : vector<48x128xi32>
    %c48_i32 = arith.constant 48 : i32
    %12 = arith.muli %10, %c48_i32 : i32
    %13 = vector.broadcast %12 : i32 to vector<48x128xi32>
    %14 = arith.addi %11, %13 : vector<48x128xi32>
    %c48_i32_4 = arith.constant 48 : i32
    %15 = vector.broadcast %c48_i32_4 : i32 to vector<48x128xi32>
    %16 = arith.cmpi slt, %14, %15 : vector<48x128xi32>
    %cst_5 = arith.constant 0.000000e+00 : f32
    %17 = vector.broadcast %cst_5 : f32 to vector<48x128xf32>
    %18 = arith.select %16, %8, %17 : vector<48x128xi1>, vector<48x128xf32>
    %c0_6 = arith.constant 0 : index
    %c0_7 = arith.constant 0 : index
    %c0_8 = arith.constant 0 : index
    %19 = vector.load %arg4[%c0_6, %c0_7, %c0_8] : memref<1x8x128xf32, #tpu.memory_space<vmem>>, vector<1x8x128xf32>
    %20 = vector.shape_cast %18 : vector<48x128xf32> to vector<1x6x8x128xf32>
    %cst_9 = arith.constant dense<0.000000e+00> : vector<1x8x128xf32>
    %21 = vector.multi_reduction <add>, %20, %cst_9 [1] : vector<1x6x8x128xf32> to vector<1x8x128xf32>
    %22 = arith.addf %19, %21 : vector<1x8x128xf32>
    %c0_10 = arith.constant 0 : index
    %c0_11 = arith.constant 0 : index
    %c0_12 = arith.constant 0 : index
    %23 = vector.load %arg4[%c0_10, %c0_11, %c0_12] : memref<1x8x128xf32, #tpu.memory_space<vmem>>, vector<1x8x128xf32>
    tpu.vector_store %arg4[%c0_10, %c0_11, %c0_12], %22 {strides = array<i32>} : memref<1x8x128xf32, #tpu.memory_space<vmem>>, vector<1x8x128xf32>,
    return
  }
  func.func @transform_0(%arg0: i32, %arg1: i32) -> (i32, i32) {
    %c1_i32 = arith.constant 1 : i32
    %0 = arith.muli %arg0, %c1_i32 : i32
    %1 = arith.addi %0, %arg1 : i32
    %c0_i32 = arith.constant 0 : i32
    %2 = arith.minsi %1, %c0_i32 : i32
    %c0_i32_0 = arith.constant 0 : i32
    %c0_i32_1 = arith.constant 0 : i32
    return %2, %c0_i32_0 : i32, i32
  }
  func.func @transform_1(%arg0: i32, %arg1: i32) -> (i32, i32) {
    %c1_i32 = arith.constant 1 : i32
    %0 = arith.muli %arg0, %c1_i32 : i32
    %1 = arith.addi %0, %arg1 : i32
    %c0_i32 = arith.constant 0 : i32
    %2 = arith.minsi %1, %c0_i32 : i32
    %c0_i32_0 = arith.constant 0 : i32
    %c0_i32_1 = arith.constant 0 : i32
    return %2, %c0_i32_0 : i32, i32
  }
  func.func @transform_2(%arg0: i32, %arg1: i32) -> (i32, i32, i32) {
    %c0_i32 = arith.constant 0 : i32
    %c0_i32_0 = arith.constant 0 : i32
    %c0_i32_1 = arith.constant 0 : i32
    return %arg0, %c0_i32, %c0_i32_0 : i32, i32, i32
  }
}

</mosaic_0001>

<llo_original>
// kernel: multi_ce_loss.1
$region0: #{multi_ce_loss.1}
  #allocation0 [shape = 'u32[]', space=smem, size = 0x4, offset = 0x4, fixed_abs, tag = 'smem constant byte address 0x4 - core index']
  #allocation1 [shape = 'u32[144,128]{1,0:T(1,128)}', space=vmem, size = 0x12000, scoped, tag = 'internal scratch']
  %s0 = inlined_call_operand.vmem [shape: f32[48,128], index: 0, kind: input, shape index: {}]
  %s1 = inlined_call_operand.vmem [shape: f32[48,128], index: 1, kind: input, shape index: {}]
  %s2 = inlined_call_operand.vmem [shape: f32[2,8,128], index: 2, kind: output, shape index: {}]
  %s3 = sld [smem:[#allocation0]]
  $region45: #{multi_ce_loss.1} parent=0
    _
  %s5 = ssub.s32 1, %s3
  %s6 = scalar_select 0, %s5, %s3
  loop: start=0, step=1, limit=4
  $region2: #{multi_ce_loss.1} parent=0 // loop_pre_header
    _
  $region3: #{multi_ce_loss.1} parent=0 // loop_header
    %s8 = sphi 0, %s12
    %p9 = scmp.ge.s32.totalorder %s8, 4
    %s15 = sphi 0, %s27
    %s16 = sphi 0, %s23
    %s17 = sphi 0, %s15
    %s18 = sphi 0, %s16
    %s19 = sphi 0, %s17
    %s20 = sphi 0, %s18
    %s36 = sphi 0, %s38
    %s39 = sphi 0, %s36
    %s40 = sphi 0, %s39
    %s56 = sphi 0, %s40
    %s68 = sphi 0, %s70
    %s71 = sphi 0, %s68
    %s72 = sphi 0, %s71
    %s88 = sphi 0, %s72
    %s94 = sphi 0, %s96
    %s97 = sphi 0, %s94
    %s98 = sphi 0, %s97
    %s114 = sphi 0, %s98
  $region4: #{multi_ce_loss.1} parent=0 // loop_header_branch
    %11 = sbr.rel (%p9) target = $region8
  $region5: #{multi_ce_loss.1} parent=0 // loop_body
    %s13 = ssub.s32 %s8, 1
    %s14 = ssub.s32 %s8, 2
    %s21 = sadd.s32 1, %s16
    %p22 = scmp.ge.s32.totalorder %s21, 1
    %s23 = scalar_select %p22, 0, %s21
    %s24 = sadd.s32 1, %s15
    %s25 = scalar_select %p22, %s24, %s15
    %p26 = scmp.ge.s32.totalorder %s25, 2
    %s27 = scalar_select %p26, 0, %s25
    %s28 = sadd.s32 %s15, %s16
    %p29 = scmp.lt.s32.totalorder %s28, 0
    %s30 = scalar_select %p29, %s28, 0
    %s31 = sadd.s32 %s27, %s23
    %p32 = scmp.lt.s32.totalorder %s31, 0
    %s33 = scalar_select %p32, %s31, 0
    %s34 = ssub.s32 %s30, %s33
    %p35 = scmp.eq.s32.totalorder %s34, 0
    %s37 = sadd.s32 %s36, 1
    %s38 = scalar_select %p35, %s36, %s37
    %p41 = pneg %p35
    %p42 = scmp.eq.s32.totalorder %s8, 1
    %p43 = por %p41, %p42
    %p44 = scmp.ne.s32.totalorder %s36, %s39
    %p45 = scmp.eq.s32.totalorder %s8, 0
    %p46 = por %p44, %p45
    %p47 = scmp.ne.s32.totalorder %s36, %s39
    %p48 = scmp.eq.s32.totalorder %s13, 1
    %p49 = por %p47, %p48
    %p50 = scmp.ne.s32.totalorder %s39, %s40
    %p51 = scmp.eq.s32.totalorder %s13, 0
    %p52 = por %p50, %p51
    %p53 = scmp.ne.s32.totalorder %s39, %s40
    %p54 = scmp.eq.s32.totalorder %s14, 1
    %p55 = por %p53, %p54
    %p57 = scmp.ne.s32.totalorder %s40, %s56
    %p58 = scmp.eq.s32.totalorder %s14, 0
    %p59 = por %p57, %p58
    %s60 = sadd.s32 %s15, %s16
    %p61 = scmp.lt.s32.totalorder %s60, 0
    %s62 = scalar_select %p61, %s60, 0
    %s63 = sadd.s32 %s27, %s23
    %p64 = scmp.lt.s32.totalorder %s63, 0
    %s65 = scalar_select %p64, %s63, 0
    %s66 = ssub.s32 %s62, %s65
    %p67 = scmp.eq.s32.totalorder %s66, 0
    %s69 = sadd.s32 %s68, 1
    %s70 = scalar_select %p67, %s68, %s69
    %p73 = pneg %p67
    %p74 = scmp.eq.s32.totalorder %s8, 1
    %p75 = por %p73, %p74
    %p76 = scmp.ne.s32.totalorder %s68, %s71
    %p77 = scmp.eq.s32.totalorder %s8, 0
    %p78 = por %p76, %p77
    %p79 = scmp.ne.s32.totalorder %s68, %s71
    %p80 = scmp.eq.s32.totalorder %s13, 1
    %p81 = por %p79, %p80
    %p82 = scmp.ne.s32.totalorder %s71, %s72
    %p83 = scmp.eq.s32.totalorder %s13, 0
    %p84 = por %p82, %p83
    %p85 = scmp.ne.s32.totalorder %s71, %s72
    %p86 = scmp.eq.s32.totalorder %s14, 1
    %p87 = por %p85, %p86
    %p89 = scmp.ne.s32.totalorder %s72, %s88
    %p90 = scmp.eq.s32.totalorder %s14, 0
    %p91 = por %p89, %p90
    %s92 = ssub.s32 %s15, %s27
    %p93 = scmp.eq.s32.totalorder %s92, 0
    %s95 = sadd.s32 %s94, 1
    %s96 = scalar_select %p93, %s94, %s95
    %p99 = pneg %p93
    %p100 = scmp.eq.s32.totalorder %s8, 1
    %p101 = por %p99, %p100
    %p102 = scmp.ne.s32.totalorder %s94, %s97
    %p103 = scmp.eq.s32.totalorder %s8, 0
    %p104 = por %p102, %p103
    %p105 = scmp.ne.s32.totalorder %s94, %s97
    %p106 = scmp.eq.s32.totalorder %s13, 1
    %p107 = por %p105, %p106
    %p108 = scmp.ne.s32.totalorder %s97, %s98
    %p109 = scmp.eq.s32.totalorder %s13, 0
    %p110 = por %p108, %p109
    %p111 = scmp.ne.s32.totalorder %s97, %s98
    %p112 = scmp.eq.s32.totalorder %s14, 1
    %p113 = por %p111, %p112
    %p115 = scmp.ne.s32.totalorder %s98, %s114
    %p116 = scmp.eq.s32.totalorder %s14, 0
    %p117 = por %p115, %p116
    %p118 = scmp.le.s32.totalorder 1, %s8
    %p119 = scmp.lt.s32.totalorder %s8, 3
    %p120 = pnand %p118, %p119
    %p121 = pneg %p120
    // Predicated region
    $region9: #{multi_ce_loss.1} parent=5 // pred_check
      _
    $region10: #{multi_ce_loss.1} parent=5 // pred_check_branch
      %123 = sbr.rel (%p120) target = $region12
    $region11: #{multi_ce_loss.1} parent=5 // pred_region
      %s124 = ssub.s32 %s8, 1
    $region12: #{multi_ce_loss.1} parent=5 // pred_fallthru
      _
    %p125 = scmp.lt.s32.totalorder %s8, 2
    // Predicated region
    $region13: #{multi_ce_loss.1} parent=5 // pred_check
      %p126 = pneg %p125
    $region14: #{multi_ce_loss.1} parent=5 // pred_check_branch
      %128 = sbr.rel (%p126) target = $region16
    $region15: #{multi_ce_loss.1} parent=5 // pred_region
      // Predicated region
      $region17: #{multi_ce_loss.1} parent=15 // pred_check
        %p129 = pneg %p46
      $region18: #{multi_ce_loss.1} parent=15 // pred_check_branch
        %131 = sbr.rel (%p129) target = $region20
      $region19: #{multi_ce_loss.1} parent=15 // pred_region
        %s132 = sadd.s32 %s15, %s16
        %p133 = scmp.lt.s32.totalorder %s132, 0
        %s134 = scalar_select %p133, %s132, 0
        %s135 = smul.u32 6, %s134
        %p136 = scmp.lt.s32.totalorder %s135, 5
        %s137 = scalar_select %p136, %s135, 5
        %s138 = smul.addr %s137, 8
        %s139 = scalar_lea.vmem %s0, %s138
        %s140 = sadd.s32 %s15, %s16
        %p141 = scmp.lt.s32.totalorder %s140, 0
        %s142 = scalar_select %p141, %s140, 0
        %s143 = smul.u32 6, %s142
      $region20: #{multi_ce_loss.1} parent=15 // pred_fallthru
        _
      // Predicated region
      $region21: #{multi_ce_loss.1} parent=15 // pred_check
        %p144 = pneg %p78
      $region22: #{multi_ce_loss.1} parent=15 // pred_check_branch
        %146 = sbr.rel (%p144) target = $region24
      $region23: #{multi_ce_loss.1} parent=15 // pred_region
        %s147 = sadd.s32 %s15, %s16
        %p148 = scmp.lt.s32.totalorder %s147, 0
        %s149 = scalar_select %p148, %s147, 0
        %s150 = smul.u32 6, %s149
        %p151 = scmp.lt.s32.totalorder %s150, 5
        %s152 = scalar_select %p151, %s150, 5
        %s153 = smul.addr %s152, 8
        %s154 = scalar_lea.vmem %s1, %s153
        %s155 = sadd.s32 %s15, %s16
        %p156 = scmp.lt.s32.totalorder %s155, 0
        %s157 = scalar_select %p156, %s155, 0
        %s158 = smul.u32 6, %s157
      $region24: #{multi_ce_loss.1} parent=15 // pred_fallthru
        _
    $region16: #{multi_ce_loss.1} parent=5 // pred_fallthru
      _
    %p159 = scmp.le.s32.totalorder 1, %s8
    %p160 = scmp.lt.s32.totalorder %s8, 3
    %p161 = pnand %p159, %p160
    %p162 = pneg %p161
    // Predicated region
    $region25: #{multi_ce_loss.1} parent=5 // pred_check
      _
    $region26: #{multi_ce_loss.1} parent=5 // pred_check_branch
      %164 = sbr.rel (%p161) target = $region28
    $region27: #{multi_ce_loss.1} parent=5 // pred_region
      %s165 = ssub.s32 %s8, 1
      %s166 = sadd.s32 %s17, %s18
      %p167 = scmp.lt.s32.totalorder %s166, 0
      %s168 = scalar_select %p167, %s166, 0
      %s169 = smul.u32 6, %s168
      %p170 = scmp.lt.s32.totalorder %s169, 5
      %s171 = scalar_select %p170, %s169, 5
      %s172 = smul.addr %s171, 8
      %s173 = scalar_lea.vmem %s0, %s172
      %p174 = pneg %p52
      %p175 = pneg %p49
      %s176 = sadd.s32 %s17, %s18
      %p177 = scmp.lt.s32.totalorder %s176, 0
      %s178 = scalar_select %p177, %s176, 0
      %s179 = smul.u32 6, %s178
      %p180 = scmp.lt.s32.totalorder %s179, 5
      %s181 = scalar_select %p180, %s179, 5
      %s182 = smul.addr %s181, 8
      %s183 = scalar_lea.vmem %s1, %s182
      %p184 = pneg %p84
      %p185 = pneg %p81
      %p186 = pneg %p110
      %p187 = pneg %p107
      %p188 = scmp.lt.s32.totalorder %s17, 1
      %s189 = scalar_select %p188, %s17, 1
      %s190 = smul.addr %s189, 8
      %s191 = scalar_lea.vmem %s2, %s190
      %s192 = sadd.s32 %s17, %s18
      %p193 = scmp.lt.s32.totalorder %s192, 0
      %s194 = scalar_select %p193, %s192, 0
      %s195 = smul.u32 6, %s194
      %p196 = scmp.lt.s32.totalorder %s195, 5
      %s197 = scalar_select %p196, %s195, 5
      %s198 = smul.addr %s197, 8
      %s199 = scalar_lea.vmem %s0, %s198
      %s200 = sadd.s32 %s17, %s18
      %p201 = scmp.lt.s32.totalorder %s200, 0
      %s202 = scalar_select %p201, %s200, 0
      %s203 = smul.u32 6, %s202
      %s204 = sadd.s32 %s17, %s18
      %p205 = scmp.lt.s32.totalorder %s204, 0
      %s206 = scalar_select %p205, %s204, 0
      %s207 = smul.u32 6, %s206
      %p208 = scmp.lt.s32.totalorder %s207, 5
      %s209 = scalar_select %p208, %s207, 5
      %s210 = smul.addr %s209, 8
      %s211 = scalar_lea.vmem %s1, %s210
      %s212 = sadd.s32 %s17, %s18
      %p213 = scmp.lt.s32.totalorder %s212, 0
      %s214 = scalar_select %p213, %s212, 0
      %s215 = smul.u32 6, %s214
      %p216 = scmp.lt.s32.totalorder %s17, 1
      %s217 = scalar_select %p216, %s17, 1
      %s218 = smul.addr %s217, 8
      %s219 = scalar_lea.vmem %s2, %s218
      %p220 = scmp.eq.s32.totalorder %s18, 0
      // Predicated region
      $region29: #{multi_ce_loss.1} parent=27 // pred_check
        %p221 = pneg %p220
      $region30: #{multi_ce_loss.1} parent=27 // pred_check_branch
        %223 = sbr.rel (%p221) target = $region32
      $region31: #{multi_ce_loss.1} parent=27 // pred_region
        %224 = vst [vmem:[%s219] sm:$0xff] 0.0
      $region32: #{multi_ce_loss.1} parent=27 // pred_fallthru
        _
      %v225 = vld [vmem:[%s199] sm:$0xff]
      %v226 = vld [vmem:[%s199 + $0x8] sm:$0xff]
      %v227 = vld [vmem:[%s199 + $0x10] sm:$0xff]
      %v228 = vld [vmem:[%s199 + $0x18] sm:$0xff]
      %v229 = vld [vmem:[%s199 + $0x20] sm:$0xff]
      %v230 = vld [vmem:[%s199 + $0x28] sm:$0xff]
      %v231 = vld [vmem:[%s211] sm:$0xff]
      %v232 = vld [vmem:[%s211 + $0x8] sm:$0xff]
      %v233 = vld [vmem:[%s211 + $0x10] sm:$0xff]
      %v234 = vld [vmem:[%s211 + $0x18] sm:$0xff]
      %v235 = vld [vmem:[%s211 + $0x20] sm:$0xff]
      %v236 = vld [vmem:[%s211 + $0x28] sm:$0xff]
      %v237 = vadd.f32 %v225, 1e-06
      %v238 = vadd.f32 %v226, 1e-06
      %v239 = vadd.f32 %v227, 1e-06
      %v240 = vadd.f32 %v228, 1e-06
      %v241 = vadd.f32 %v229, 1e-06
      %v242 = vadd.f32 %v230, 1e-06
      %v243 = vlog2.pop %v237
      %v244 = vmul.f32 %v243, 0.6931472
      %v245 = vlog2.pop %v238
      %v246 = vmul.f32 %v245, 0.6931472
      %v247 = vlog2.pop %v239
      %v248 = vmul.f32 %v247, 0.6931472
      %v249 = vlog2.pop %v240
      %v250 = vmul.f32 %v249, 0.6931472
      %v251 = vlog2.pop %v241
      %v252 = vmul.f32 %v251, 0.6931472
      %v253 = vlog2.pop %v242
      %v254 = vmul.f32 %v253, 0.6931472
      %v255 = vmul.f32 %v231, %v244
      %v256 = vmul.f32 %v232, %v246
      %v257 = vmul.f32 %v233, %v248
      %v258 = vmul.f32 %v234, %v250
      %v259 = vmul.f32 %v235, %v252
      %v260 = vmul.f32 %v236, %v254
      %s261 = sadd.s32 %s17, %s18
      %v262 = vlaneseq
      %v263 = vshrl.u32 %v262, 7
      %v264 = vadd.s32 %v263, 8
      %v265 = vadd.s32 %v263, 16
      %v266 = vadd.s32 %v263, 24
      %v267 = vadd.s32 %v263, 32
      %v268 = vadd.s32 %v263, 40
      %s269 = smul.u32 %s261, 48
      %v270 = vstv %s269
      %v271 = vadd.s32 %v263, %v270
      %v272 = vadd.s32 %v264, %v270
      %v273 = vadd.s32 %v265, %v270
      %v274 = vadd.s32 %v266, %v270
      %v275 = vadd.s32 %v267, %v270
      %v276 = vadd.s32 %v268, %v270
      %vm277 = vcmp.lt.s32.totalorder %v271, 48
      %vm278 = vcmp.lt.s32.totalorder %v272, 48
      %vm279 = vcmp.lt.s32.totalorder %v273, 48
      %vm280 = vcmp.lt.s32.totalorder %v274, 48
      %vm281 = vcmp.lt.s32.totalorder %v275, 48
      %vm282 = vcmp.lt.s32.totalorder %v276, 48
      %v283 = vsel %vm277, %v255, 0.0
      %v284 = vsel %vm278, %v256, 0.0
      %v285 = vsel %vm279, %v257, 0.0
      %v286 = vsel %vm280, %v258, 0.0
      %v287 = vsel %vm281, %v259, 0.0
      %v288 = vsel %vm282, %v260, 0.0
      %v289 = vld [vmem:[%s219] sm:$0xff]
      %v290 = vadd.f32 %v283, %v284
      %v291 = vadd.f32 %v290, %v285
      %v292 = vadd.f32 %v291, %v286
      %v293 = vadd.f32 %v292, %v287
      %v294 = vadd.f32 %v293, %v288
      %v295 = vadd.f32 %v289, %v294
      %296 = vst [vmem:[%s219] sm:$0xff] %v295
      %p297 = scmp.lt.s32.totalorder %s17, 1
      %s298 = scalar_select %p297, %s17, 1
      %s299 = smul.addr %s298, 8
      %s300 = scalar_lea.vmem %s2, %s299
      // Predicated region
      $region33: #{multi_ce_loss.1} parent=27 // pred_check
        %p301 = pneg %p107
      $region34: #{multi_ce_loss.1} parent=27 // pred_check_branch
        %303 = sbr.rel (%p301) target = $region36
      $region35: #{multi_ce_loss.1} parent=27 // pred_region
        _
      $region36: #{multi_ce_loss.1} parent=27 // pred_fallthru
        _
    $region28: #{multi_ce_loss.1} parent=5 // pred_fallthru
      _
    %p304 = scmp.le.s32.totalorder 2, %s8
    // Predicated region
    $region37: #{multi_ce_loss.1} parent=5 // pred_check
      %p305 = pneg %p304
    $region38: #{multi_ce_loss.1} parent=5 // pred_check_branch
      %307 = sbr.rel (%p305) target = $region40
    $region39: #{multi_ce_loss.1} parent=5 // pred_region
      %s308 = ssub.s32 %s8, 2
      // Predicated region
      $region41: #{multi_ce_loss.1} parent=39 // pred_check
        %p309 = pneg %p113
      $region42: #{multi_ce_loss.1} parent=39 // pred_check_branch
        %311 = sbr.rel (%p309) target = $region44
      $region43: #{multi_ce_loss.1} parent=39 // pred_region
        %p312 = scmp.lt.s32.totalorder %s19, 1
        %s313 = scalar_select %p312, %s19, 1
        %s314 = smul.addr %s313, 8
        %s315 = scalar_lea.vmem %s2, %s314
      $region44: #{multi_ce_loss.1} parent=39 // pred_fallthru
        _
    $region40: #{multi_ce_loss.1} parent=5 // pred_fallthru
      _
  $region6: #{multi_ce_loss.1} parent=0 // loop_footer
    %s12 = sadd.s32 1, %s8
  $region7: #{multi_ce_loss.1} parent=0 // loop_footer_branch
    %7 = sbr.rel target = $region3
  $region8: #{multi_ce_loss.1} parent=0 // loop_exit
    _

</llo_original>
